<compile_context>
chip_gen: v7x
topology: tpu7x:2x2x1
jax: 0.10.0
libtpu: 0.0.40
codegen_flags: <defaults>
</compile_context>

<pallas_src>
import functools
import math

import jax
import jax.numpy as jnp
from jax.experimental import pallas as pl
from jax.experimental.pallas import tpu as pltpu


def _round_up(n: int, m: int) -> int:
    return ((n + m - 1) // m) * m


def _tpu_vmem_and_gen():
    """Best-effort physical VMEM capacity + coarse generation flag."""
    try:
        vmem = int(pltpu.get_tpu_info().vmem_capacity_bytes)
    except Exception:
        vmem = 64 << 20          # safe fallback on every generation
    kind = ""
    try:
        kind = jax.devices()[0].device_kind.lower()
    except Exception:
        pass
    is_v5 = "v5" in kind          # v5e: 128x128 MXU, keep smaller row tiles
    return vmem, is_v5


# ---------------------------------------------------------------------------
# Kernel: one (row-tile i, out-tile j, mid-panel k) step.
# ---------------------------------------------------------------------------
def mlp_kernel(x_ref, w1_ref, b1_ref, w2_ref, b2_ref, o_ref, acc_ref):
    k = pl.program_id(2)

    @pl.when(k == 0)
    def _():
        acc_ref[...] = jnp.zeros_like(acc_ref)

    # First Linear (this mid-panel) + bias + ReLU.  f32 accumulation on MXU.
    h = jnp.dot(x_ref[...], w1_ref[...], preferred_element_type=jnp.float32)
    h = jnp.maximum(h + b1_ref[...], 0.0)

    # Second Linear: this mid-panel's contribution to the (i, j) output tile.
    acc_ref[...] += jnp.dot(h.astype(w2_ref.dtype), w2_ref[...],
                            preferred_element_type=jnp.float32)

    @pl.when(k == pl.num_programs(2) - 1)
    def _():
        o_ref[...] = (acc_ref[...] + b2_ref[...]).astype(o_ref.dtype)


# ---------------------------------------------------------------------------
# Config selection (done once per weight set, independent of batch size).
# ---------------------------------------------------------------------------
def _select_config(in_size, mid_size, out_size, itemsize):
    vmem_cap, is_v5 = _tpu_vmem_and_gen()

    # MXU is 256x256 on v6e/v7x (128x128 on v5e): pad K/N panels accordingly.
    align = 128 if is_v5 else 256

    in_p = _round_up(in_size, align)
    mid_p = _round_up(mid_size, align)
    out_p = _round_up(out_size, align)

    # Generation-aware row-tile target (compute-bound thresholds).
    if vmem_cap <= (64 << 20):        # v7x: 64 MiB VMEM, very fast HBM
        tile_m = 512
    elif is_v5:                        # v5e
        tile_m = 256
    else:                              # v6e
        tile_m = 1024

    # Request ~87% of physical VMEM; fit blocks into ~85% of the request so
    # Mosaic keeps headroom for its own scratch / semaphores.
    vmem_limit = max(min(int(vmem_cap * 0.875), vmem_cap - (8 << 20)), 32 << 20)
    budget = int(vmem_limit * 0.85)

    tile_mid = mid_p                   # resident weights when they fit
    tile_n = out_p

    def fp(tm, tmid, tn):
        return (2 * tm * in_p * itemsize        # x blocks (double buffered)
                + 2 * in_p * tmid * itemsize    # W1 blocks
                + 2 * tmid * itemsize           # b1
                + 2 * tmid * tn * itemsize      # W2 blocks
                + 2 * tn * itemsize             # b2
                + 2 * tm * tn * itemsize        # out blocks
                + tm * tn * 4                   # f32 accumulator scratch
                + 2 * tm * tmid * 4)            # f32 intermediate h staging

    # Shrink in order of least performance impact until the blocks fit.
    while fp(tile_m, tile_mid, tile_n) > budget and tile_n > 2048:
        tile_n = max(2048, _round_up(tile_n // 2, align))
    while fp(tile_m, tile_mid, tile_n) > budget and tile_mid > 512:
        tile_mid = max(512, _round_up(tile_mid // 2, align))
    while fp(tile_m, tile_mid, tile_n) > budget and tile_m > 256:
        tile_m //= 2
    while fp(tile_m, tile_mid, tile_n) > budget and tile_n > align:
        tile_n = max(align, _round_up(tile_n // 2, align))
    while fp(tile_m, tile_mid, tile_n) > budget and tile_mid > align:
        tile_mid = max(align, _round_up(tile_mid // 2, align))
    while fp(tile_m, tile_mid, tile_n) > budget and tile_m > 128:
        tile_m //= 2

    # Re-pad feature dims up to tile multiples (zero padding is exact).
    mid_p = _round_up(mid_p, tile_mid)
    out_p = _round_up(out_p, tile_n)

    return dict(in_p=in_p, mid_p=mid_p, out_p=out_p,
                tile_m=tile_m, tile_mid=tile_mid, tile_n=tile_n,
                vmem_limit=int(vmem_limit))


# ---------------------------------------------------------------------------
# 2-D pallas_call wrapper (x already flattened to (M, in_size)).
# ---------------------------------------------------------------------------
def _mlp_pallas_2d(x, w1p, b1p, w2p, b2p, *, in_size, out_size,
                   cfg_tile_m, tile_mid, tile_n, vmem_limit):
    M = x.shape[0]
    in_p, mid_p = w1p.shape
    out_p = w2p.shape[1]
    itemsize = jnp.dtype(x.dtype).itemsize

    tile_m = min(cfg_tile_m, _round_up(max(M, 1), 128))
    m_p = _round_up(M, tile_m)

    # Only x is padded per call; the weights were padded once in make_mlp.
    xp = jnp.pad(x, ((0, m_p - M), (0, in_p - in_size)))

    m_tiles = m_p // tile_m
    n_tiles = out_p // tile_n
    k_tiles = mid_p // tile_mid
    grid = (m_tiles, n_tiles, k_tiles)

    # Actual HBM traffic: weights are re-streamed per (row-tile, out-tile)
    # unless the mid axis collapses (k_tiles == 1 -> weights resident).
    w1_sweeps = 1 if k_tiles == 1 else m_tiles * n_tiles
    w2_sweeps = 1 if (k_tiles == 1 and n_tiles == 1) else m_tiles
    cost = pl.CostEstimate(
        flops=2 * m_p * (in_p * mid_p * n_tiles + mid_p * out_p),
        transcendentals=0,
        bytes_accessed=int(
            (xp.size + m_p * out_p) * itemsize
            + w1_sweeps * w1p.size * itemsize
            + w2_sweeps * w2p.size * itemsize
            + (b1p.size + b2p.size) * itemsize),
    )

    out = pl.pallas_call(
        mlp_kernel,
        out_shape=jax.ShapeDtypeStruct((m_p, out_p), x.dtype),
        grid_spec=pltpu.PrefetchScalarGridSpec(
            num_scalar_prefetch=0,
            grid=grid,
            in_specs=[
                pl.BlockSpec((tile_m, in_p), lambda i, j, k: (i, 0)),
                pl.BlockSpec((in_p, tile_mid), lambda i, j, k: (0, k)),
                pl.BlockSpec((1, tile_mid), lambda i, j, k: (0, k)),
                pl.BlockSpec((tile_mid, tile_n), lambda i, j, k: (k, j)),
                pl.BlockSpec((1, tile_n), lambda i, j, k: (0, j)),
            ],
            out_specs=pl.BlockSpec((tile_m, tile_n), lambda i, j, k: (i, j)),
            scratch_shapes=[pltpu.VMEM((tile_m, tile_n), jnp.float32)],
        ),
        compiler_params=pltpu.CompilerParams(
            dimension_semantics=("parallel", "parallel", "arbitrary"),
            vmem_limit_bytes=vmem_limit,
        ),
        cost_estimate=cost,
    )(xp, w1p, b1p, w2p, b2p)

    return out[:M, :out_size]


# ---------------------------------------------------------------------------
# Public API: pad weights ONCE, return a jitted forward.
# ---------------------------------------------------------------------------
def make_mlp(w1, b1, w2, b2):
    """Weight layout: w1 (in, mid), w2 (mid, out) (transposed vs nn.Linear).

    Returns (forward, padded_params); call forward(x, *padded_params) with
    x of shape (..., in_size).
    """
    in_size, mid_size = w1.shape
    out_size = w2.shape[1]
    itemsize = jnp.dtype(w1.dtype).itemsize
    cfg = _select_config(in_size, mid_size, out_size, itemsize)
    in_p, mid_p, out_p = cfg["in_p"], cfg["mid_p"], cfg["out_p"]

    # One-time weight padding: avoids a full per-call HBM copy of W1/W2.
    w1p = jnp.pad(w1, ((0, in_p - in_size), (0, mid_p - mid_size)))
    b1p = jnp.pad(b1.reshape(1, -1), ((0, 0), (0, mid_p - mid_size)))
    w2p = jnp.pad(w2, ((0, mid_p - mid_size), (0, out_p - out_size)))
    b2p = jnp.pad(b2.reshape(1, -1), ((0, 0), (0, out_p - out_size)))

    mlp_2d = functools.partial(
        _mlp_pallas_2d,
        in_size=in_size, out_size=out_size,
        cfg_tile_m=cfg["tile_m"], tile_mid=cfg["tile_mid"],
        tile_n=cfg["tile_n"], vmem_limit=cfg["vmem_limit"])

    @jax.jit
    def forward(x, w1p, b1p, w2p, b2p):
        *lead, d = x.shape
        x2d = x.reshape(-1, d)
        out2d = mlp_2d(x2d, w1p, b1p, w2p, b2p)
        return out2d.reshape(*lead, out_size)

    return forward, (w1p, b1p, w2p, b2p)


if __name__ == "__main__":
    # Small shapes consistent with the MLP module.
    batch, seq = 2, 8
    in_size, mid_size, out_size = 32, 64, 32

    key = jax.random.PRNGKey(0)
    kx, kw1, kb1, kw2, kb2 = jax.random.split(key, 5)

    x = jax.random.normal(kx, (batch, seq, in_size), dtype=jnp.float32)

    # Deterministic parameter init (PyTorch Linear-style uniform bounds).
    bound1 = 1.0 / math.sqrt(in_size)
    w1 = jax.random.uniform(kw1, (in_size, mid_size), jnp.float32, -bound1, bound1)
    b1 = jax.random.uniform(kb1, (mid_size,), jnp.float32, -bound1, bound1)
    bound2 = 1.0 / math.sqrt(mid_size)
    w2 = jax.random.uniform(kw2, (mid_size, out_size), jnp.float32, -bound2, bound2)
    b2 = jax.random.uniform(kb2, (out_size,), jnp.float32, -bound2, bound2)

    # TODO(synk): dropout (dropout_r > 0, training mode) is intentionally
    # skipped — this kernel implements the inference forward pass.

    # f32 path: exact check against the pure-JAX reference.
    forward, params = make_mlp(w1, b1, w2, b2)
    out = jax.block_until_ready(forward(x, *params))
    ref = jnp.maximum(x @ w1 + b1, 0.0) @ w2 + b2
    assert out.shape == (batch, seq, out_size)
    assert jnp.allclose(out, ref, atol=1e-5, rtol=1e-5), "f32 mismatch vs reference"

    # bf16 path (recommended deployment dtype; f32 accumulation kept inside).
    fwd_bf16, params_bf16 = make_mlp(
        w1.astype(jnp.bfloat16), b1.astype(jnp.bfloat16),
        w2.astype(jnp.bfloat16), b2.astype(jnp.bfloat16))
    out_bf16 = jax.block_until_ready(fwd_bf16(x.astype(jnp.bfloat16), *params_bf16))
    assert jnp.allclose(out_bf16.astype(jnp.float32), ref, atol=7e-2, rtol=7e-2), \
        "bf16 mismatch vs reference"

    print("KERNEL_OK")
</pallas_src>

<mosaic_0001>
module attributes {stable_mosaic.version = 11 : i64} {
  func.func @mlp_kernel(%arg0: i32, %arg1: i32, %arg2: i32, %arg3: memref<128x256xf32, #tpu.memory_space<vmem>>, %arg4: memref<256x256xf32, #tpu.memory_space<vmem>>, %arg5: memref<1x256xf32, #tpu.memory_space<vmem>>, %arg6: memref<256x256xf32, #tpu.memory_space<vmem>>, %arg7: memref<1x256xf32, #tpu.memory_space<vmem>>, %arg8: memref<128x256xf32, #tpu.memory_space<vmem>>, %arg9: memref<128x256xf32, #tpu.memory_space<vmem>>) attributes {dimension_semantics = [#tpu.dimension_semantics<parallel>, #tpu.dimension_semantics<parallel>, #tpu.dimension_semantics<arbitrary>], iteration_bounds = array<i64: 1, 1, 1>, scalar_prefetch = 0 : i64, scratch_operands = 1 : i64, tpu.core_type = #tpu.core_type<tc>, window_params = [{transform_indices = @transform_0, window_bounds = array<i64: 128, 256>}, {transform_indices = @transform_1, window_bounds = array<i64: 256, 256>}, {transform_indices = @transform_2, window_bounds = array<i64: 1, 256>}, {transform_indices = @transform_3, window_bounds = array<i64: 256, 256>}, {transform_indices = @transform_4, window_bounds = array<i64: 1, 256>}, {transform_indices = @transform_5, window_bounds = array<i64: 128, 256>}]} {
    %c0_i32 = arith.constant 0 : i32
    %0 = arith.cmpi eq, %arg2, %c0_i32 : i32
    %1 = arith.extui %0 : i1 to i32
    %c0_i32_0 = arith.constant 0 : i32
    %2 = arith.cmpi ne, %1, %c0_i32_0 : i32
    scf.if %2 {
      %cst_16 = arith.constant 0.000000e+00 : f32
      %19 = vector.broadcast %cst_16 : f32 to vector<128x256xf32>
      %c0_17 = arith.constant 0 : index
      %c0_18 = arith.constant 0 : index
      %20 = vector.load %arg9[%c0_17, %c0_18] : memref<128x256xf32, #tpu.memory_space<vmem>>, vector<128x256xf32>
      tpu.vector_store %arg9[%c0_17, %c0_18], %19 {strides = array<i32>} : memref<128x256xf32, #tpu.memory_space<vmem>>, vector<128x256xf32>,
    } else {
    }
    %c0 = arith.constant 0 : index
    %c0_1 = arith.constant 0 : index
    %3 = vector.load %arg3[%c0, %c0_1] : memref<128x256xf32, #tpu.memory_space<vmem>>, vector<128x256xf32>
    %c0_2 = arith.constant 0 : index
    %c0_3 = arith.constant 0 : index
    %4 = vector.load %arg4[%c0_2, %c0_3] : memref<256x256xf32, #tpu.memory_space<vmem>>, vector<256x256xf32>
    %cst = arith.constant dense<0.000000e+00> : vector<128x256xf32>
    %5 = tpu.matmul %3, %4, %cst {dimension_numbers = #tpu.dot_dimension_numbers<[1], [0], [0], [1], [0, 0, 1, 1], [], []>} : vector<128x256xf32>, vector<256x256xf32>, vector<128x256xf32> -> vector<128x256xf32>
    %c0_4 = arith.constant 0 : index
    %c0_5 = arith.constant 0 : index
    %6 = vector.load %arg5[%c0_4, %c0_5] : memref<1x256xf32, #tpu.memory_space<vmem>>, vector<1x256xf32>
    %7 = vector.broadcast %6 : vector<1x256xf32> to vector<128x256xf32>
    %8 = arith.addf %5, %7 : vector<128x256xf32>
    %cst_6 = arith.constant 0.000000e+00 : f32
    %9 = vector.broadcast %cst_6 : f32 to vector<128x256xf32>
    %10 = arith.maximumf %8, %9 : vector<128x256xf32>
    %c0_7 = arith.constant 0 : index
    %c0_8 = arith.constant 0 : index
    %11 = vector.load %arg9[%c0_7, %c0_8] : memref<128x256xf32, #tpu.memory_space<vmem>>, vector<128x256xf32>
    %c0_9 = arith.constant 0 : index
    %c0_10 = arith.constant 0 : index
    %12 = vector.load %arg6[%c0_9, %c0_10] : memref<256x256xf32, #tpu.memory_space<vmem>>, vector<256x256xf32>
    %cst_11 = arith.constant dense<0.000000e+00> : vector<128x256xf32>
    %13 = tpu.matmul %10, %12, %cst_11 {dimension_numbers = #tpu.dot_dimension_numbers<[1], [0], [0], [1], [0, 0, 1, 1], [], []>} : vector<128x256xf32>, vector<256x256xf32>, vector<128x256xf32> -> vector<128x256xf32>
    %14 = arith.addf %11, %13 : vector<128x256xf32>
    %c0_12 = arith.constant 0 : index
    %c0_13 = arith.constant 0 : index
    %15 = vector.load %arg9[%c0_12, %c0_13] : memref<128x256xf32, #tpu.memory_space<vmem>>, vector<128x256xf32>
    tpu.vector_store %arg9[%c0_12, %c0_13], %14 {strides = array<i32>} : memref<128x256xf32, #tpu.memory_space<vmem>>, vector<128x256xf32>,
    %c0_i32_14 = arith.constant 0 : i32
    %16 = arith.cmpi eq, %arg2, %c0_i32_14 : i32
    %17 = arith.extui %16 : i1 to i32
    %c0_i32_15 = arith.constant 0 : i32
    %18 = arith.cmpi ne, %17, %c0_i32_15 : i32
    scf.if %18 {
      %c0_16 = arith.constant 0 : index
      %c0_17 = arith.constant 0 : index
      %19 = vector.load %arg9[%c0_16, %c0_17] : memref<128x256xf32, #tpu.memory_space<vmem>>, vector<128x256xf32>
      %c0_18 = arith.constant 0 : index
      %c0_19 = arith.constant 0 : index
      %20 = vector.load %arg7[%c0_18, %c0_19] : memref<1x256xf32, #tpu.memory_space<vmem>>, vector<1x256xf32>
      %21 = vector.broadcast %20 : vector<1x256xf32> to vector<128x256xf32>
      %22 = arith.addf %19, %21 : vector<128x256xf32>
      %c0_20 = arith.constant 0 : index
      %c0_21 = arith.constant 0 : index
      %23 = vector.load %arg8[%c0_20, %c0_21] : memref<128x256xf32, #tpu.memory_space<vmem>>, vector<128x256xf32>
      tpu.vector_store %arg8[%c0_20, %c0_21], %22 {strides = array<i32>} : memref<128x256xf32, #tpu.memory_space<vmem>>, vector<128x256xf32>,
    } else {
    }
    return
  }
  func.func @transform_0(%arg0: i32, %arg1: i32, %arg2: i32) -> (i32, i32) {
    %c0_i32 = arith.constant 0 : i32
    %c0_i32_0 = arith.constant 0 : i32
    return %arg0, %c0_i32 : i32, i32
  }
  func.func @transform_1(%arg0: i32, %arg1: i32, %arg2: i32) -> (i32, i32) {
    %c0_i32 = arith.constant 0 : i32
    %c0_i32_0 = arith.constant 0 : i32
    return %c0_i32, %arg2 : i32, i32
  }
  func.func @transform_2(%arg0: i32, %arg1: i32, %arg2: i32) -> (i32, i32) {
    %c0_i32 = arith.constant 0 : i32
    %c0_i32_0 = arith.constant 0 : i32
    return %c0_i32, %arg2 : i32, i32
  }
  func.func @transform_3(%arg0: i32, %arg1: i32, %arg2: i32) -> (i32, i32) {
    %c0_i32 = arith.constant 0 : i32
    return %arg2, %arg1 : i32, i32
  }
  func.func @transform_4(%arg0: i32, %arg1: i32, %arg2: i32) -> (i32, i32) {
    %c0_i32 = arith.constant 0 : i32
    %c0_i32_0 = arith.constant 0 : i32
    return %c0_i32, %arg1 : i32, i32
  }
  func.func @transform_5(%arg0: i32, %arg1: i32, %arg2: i32) -> (i32, i32) {
    %c0_i32 = arith.constant 0 : i32
    return %arg0, %arg1 : i32, i32
  }
}

</mosaic_0001>

<llo_original>
// kernel: forward.1
$region0: #{forward.1}
  #allocation0 [shape = 'u32[]', space=smem, size = 0x4, offset = 0x4, fixed_abs, tag = 'smem constant byte address 0x4 - core index']
  #allocation1 [shape = 'u32[144,128]{1,0:T(1,128)}', space=vmem, size = 0x12000, scoped, tag = 'internal scratch']
  #allocation2 [shape = 'f32[128,256]{1,0:T(8,128)}', space=vmem, size = 0x20000, scoped, tag = 'scratch operand']
  %s0 = inlined_call_operand.vmem [shape: f32[128,256], index: 0, kind: input, shape index: {}]
  %s1 = inlined_call_operand.hbm [shape: f32[256,256], index: 1, kind: input, shape index: {}]
  %s2 = inlined_call_operand.vmem [shape: f32[1,256], index: 2, kind: input, shape index: {}]
  %s3 = inlined_call_operand.hbm [shape: f32[256,256], index: 3, kind: input, shape index: {}]
  %s4 = inlined_call_operand.vmem [shape: f32[1,256], index: 4, kind: input, shape index: {}]
  %s5 = inlined_call_operand.vmem [shape: f32[128,256], index: 5, kind: output, shape index: {}]
  %s6 = sld [smem:[#allocation0]]
  $region46: #{forward.1} parent=0
    _
  %s8 = ssub.s32 1, %s6
  %s9 = scalar_select 0, %s8, %s6
  $region1: #{forward.1} parent=0
    #allocation3 [shape = 'u8[262144]{0}', space=vmem, size = 0x40000, scoped, tag = 'input window, operand 1, single buffered']
    #allocation4 [shape = 's32[1]{0}', space=sflag, size = 0x4, scoped, tag = 'scoped memory for forward.1']
    #allocation5 [shape = 'u8[262144]{0}', space=vmem, size = 0x40000, scoped, tag = 'input window, operand 3, single buffered']
    #allocation6 [shape = 's32[1]{0}', space=sflag, size = 0x4, scoped, tag = 'scoped memory for forward.1']
    %10 = vsyncpa [#allocation4], 0
    %11 = vsyncpa [#allocation6], 0
    // Predicated region
    $region2: #{forward.1} parent=1 // pred_check
      _
    $region3: #{forward.1} parent=1 // pred_check_branch
      %13 = sbr.rel (0) target = $region5
    $region4: #{forward.1} parent=1 // pred_region
      _
    $region5: #{forward.1} parent=1 // pred_fallthru
      _
    // Predicated region
    $region6: #{forward.1} parent=1 // pred_check
      _
    $region7: #{forward.1} parent=1 // pred_check_branch
      %15 = sbr.rel (0) target = $region9
    $region8: #{forward.1} parent=1 // pred_region
      %s17 = ssub.s32 8192, 8192
      %18 = vsyncadd [#allocation4], %s17
      %s19 = sshll.u32 [#allocation3], 4
      %s20 = int_to_ptr.vmem [resolvable:$true] %s19
      %25 = dma.hbm_to_vmem [thread:$0]  %s1, 8192, %s20, [#allocation4], 256, 256, 16
    $region9: #{forward.1} parent=1 // pred_fallthru
      _
    // Predicated region
    $region10: #{forward.1} parent=1 // pred_check
      _
    $region11: #{forward.1} parent=1 // pred_check_branch
      %27 = sbr.rel (0) target = $region13
    $region12: #{forward.1} parent=1 // pred_region
      _
    $region13: #{forward.1} parent=1 // pred_fallthru
      _
    // Predicated region
    $region14: #{forward.1} parent=1 // pred_check
      _
    $region15: #{forward.1} parent=1 // pred_check_branch
      %29 = sbr.rel (0) target = $region17
    $region16: #{forward.1} parent=1 // pred_region
      %s31 = ssub.s32 8192, 8192
      %32 = vsyncadd [#allocation6], %s31
      %s33 = sshll.u32 [#allocation5], 4
      %s34 = int_to_ptr.vmem [resolvable:$true] %s33
      %39 = dma.hbm_to_vmem [thread:$0]  %s3, 8192, %s34, [#allocation6], 256, 256, 16
    $region17: #{forward.1} parent=1 // pred_fallthru
      _
    // Predicated region
    $region18: #{forward.1} parent=1 // pred_check
      _
    $region19: #{forward.1} parent=1 // pred_check_branch
      %41 = sbr.rel (0) target = $region21
    $region20: #{forward.1} parent=1 // pred_region
      _
    $region21: #{forward.1} parent=1 // pred_fallthru
      _
    // Predicated region
    $region22: #{forward.1} parent=1 // pred_check
      _
    $region23: #{forward.1} parent=1 // pred_check_branch
      %43 = sbr.rel (0) target = $region25
    $region24: #{forward.1} parent=1 // pred_region
      %44 = dma.done [#allocation4], 8192
    $region25: #{forward.1} parent=1 // pred_fallthru
      _
    // Predicated region
    $region26: #{forward.1} parent=1 // pred_check
      _
    $region27: #{forward.1} parent=1 // pred_check_branch
      %46 = sbr.rel (0) target = $region29
    $region28: #{forward.1} parent=1 // pred_region
      %47 = dma.done [#allocation6], 8192
    $region29: #{forward.1} parent=1 // pred_fallthru
      _
    %p48 = scmp.eq.s32.totalorder 0, 0
    // Predicated region
    $region30: #{forward.1} parent=1 // pred_check
      %p49 = pneg %p48
    $region31: #{forward.1} parent=1 // pred_check_branch
      %51 = sbr.rel (%p49) target = $region33
    $region32: #{forward.1} parent=1 // pred_region
      %52 = vst [vmem:[#allocation2] sm:$0xff] 0.0
      %53 = vst [vmem:[#allocation2 + $0x8] sm:$0xff] 0.0
      %54 = vst [vmem:[#allocation2 + $0x10] sm:$0xff] 0.0
      %55 = vst [vmem:[#allocation2 + $0x18] sm:$0xff] 0.0
      %56 = vst [vmem:[#allocation2 + $0x20] sm:$0xff] 0.0
      %57 = vst [vmem:[#allocation2 + $0x28] sm:$0xff] 0.0
      %58 = vst [vmem:[#allocation2 + $0x30] sm:$0xff] 0.0
      %59 = vst [vmem:[#allocation2 + $0x38] sm:$0xff] 0.0
      %60 = vst [vmem:[#allocation2 + $0x40] sm:$0xff] 0.0
      %61 = vst [vmem:[#allocation2 + $0x48] sm:$0xff] 0.0
      %62 = vst [vmem:[#allocation2 + $0x50] sm:$0xff] 0.0
      %63 = vst [vmem:[#allocation2 + $0x58] sm:$0xff] 0.0
      %64 = vst [vmem:[#allocation2 + $0x60] sm:$0xff] 0.0
      %65 = vst [vmem:[#allocation2 + $0x68] sm:$0xff] 0.0
      %66 = vst [vmem:[#allocation2 + $0x70] sm:$0xff] 0.0
      %67 = vst [vmem:[#allocation2 + $0x78] sm:$0xff] 0.0
      %68 = vst [vmem:[#allocation2 + $0x80] sm:$0xff] 0.0
      %69 = vst [vmem:[#allocation2 + $0x88] sm:$0xff] 0.0
      %70 = vst [vmem:[#allocation2 + $0x90] sm:$0xff] 0.0
      %71 = vst [vmem:[#allocation2 + $0x98] sm:$0xff] 0.0
      %72 = vst [vmem:[#allocation2 + $0xa0] sm:$0xff] 0.0
      %73 = vst [vmem:[#allocation2 + $0xa8] sm:$0xff] 0.0
      %74 = vst [vmem:[#allocation2 + $0xb0] sm:$0xff] 0.0
      %75 = vst [vmem:[#allocation2 + $0xb8] sm:$0xff] 0.0
      %76 = vst [vmem:[#allocation2 + $0xc0] sm:$0xff] 0.0
      %77 = vst [vmem:[#allocation2 + $0xc8] sm:$0xff] 0.0
      %78 = vst [vmem:[#allocation2 + $0xd0] sm:$0xff] 0.0
      %79 = vst [vmem:[#allocation2 + $0xd8] sm:$0xff] 0.0
      %80 = vst [vmem:[#allocation2 + $0xe0] sm:$0xff] 0.0
      %81 = vst [vmem:[#allocation2 + $0xe8] sm:$0xff] 0.0
      %82 = vst [vmem:[#allocation2 + $0xf0] sm:$0xff] 0.0
      %83 = vst [vmem:[#allocation2 + $0xf8] sm:$0xff] 0.0
    $region33: #{forward.1} parent=1 // pred_fallthru
      _
    %v84 = vld [vmem:[%s0] sm:$0xff]
    %v85 = vld [vmem:[%s0 + $0x8] sm:$0xff]
    %v86 = vld [vmem:[%s0 + $0x10] sm:$0xff]
    %v87 = vld [vmem:[%s0 + $0x18] sm:$0xff]
    %v88 = vld [vmem:[%s0 + $0x20] sm:$0xff]
    %v89 = vld [vmem:[%s0 + $0x28] sm:$0xff]
    %v90 = vld [vmem:[%s0 + $0x30] sm:$0xff]
    %v91 = vld [vmem:[%s0 + $0x38] sm:$0xff]
    %v92 = vld [vmem:[%s0 + $0x40] sm:$0xff]
    %v93 = vld [vmem:[%s0 + $0x48] sm:$0xff]
    %v94 = vld [vmem:[%s0 + $0x50] sm:$0xff]
    %v95 = vld [vmem:[%s0 + $0x58] sm:$0xff]
    %v96 = vld [vmem:[%s0 + $0x60] sm:$0xff]
    %v97 = vld [vmem:[%s0 + $0x68] sm:$0xff]
    %v98 = vld [vmem:[%s0 + $0x70] sm:$0xff]
    %v99 = vld [vmem:[%s0 + $0x78] sm:$0xff]
    %v100 = vld [vmem:[%s0 + $0x80] sm:$0xff]
    %v101 = vld [vmem:[%s0 + $0x88] sm:$0xff]
    %v102 = vld [vmem:[%s0 + $0x90] sm:$0xff]
    %v103 = vld [vmem:[%s0 + $0x98] sm:$0xff]
    %v104 = vld [vmem:[%s0 + $0xa0] sm:$0xff]
    %v105 = vld [vmem:[%s0 + $0xa8] sm:$0xff]
    %v106 = vld [vmem:[%s0 + $0xb0] sm:$0xff]
    %v107 = vld [vmem:[%s0 + $0xb8] sm:$0xff]
    %v108 = vld [vmem:[%s0 + $0xc0] sm:$0xff]
    %v109 = vld [vmem:[%s0 + $0xc8] sm:$0xff]
    %v110 = vld [vmem:[%s0 + $0xd0] sm:$0xff]
    %v111 = vld [vmem:[%s0 + $0xd8] sm:$0xff]
    %v112 = vld [vmem:[%s0 + $0xe0] sm:$0xff]
    %v113 = vld [vmem:[%s0 + $0xe8] sm:$0xff]
    %v114 = vld [vmem:[%s0 + $0xf0] sm:$0xff]
    %v115 = vld [vmem:[%s0 + $0xf8] sm:$0xff]
    %v116 = vld [vmem:[#allocation3] sm:$0xff]
    %v117 = vld [vmem:[#allocation3 + $0x8] sm:$0xff]
    %v118 = vld [vmem:[#allocation3 + $0x10] sm:$0xff]
    %v119 = vld [vmem:[#allocation3 + $0x18] sm:$0xff]
    %v120 = vld [vmem:[#allocation3 + $0x20] sm:$0xff]
    %v121 = vld [vmem:[#allocation3 + $0x28] sm:$0xff]
    %v122 = vld [vmem:[#allocation3 + $0x30] sm:$0xff]
    %v123 = vld [vmem:[#allocation3 + $0x38] sm:$0xff]
    %v124 = vld [vmem:[#allocation3 + $0x40] sm:$0xff]
    %v125 = vld [vmem:[#allocation3 + $0x48] sm:$0xff]
    %v126 = vld [vmem:[#allocation3 + $0x50] sm:$0xff]
    %v127 = vld [vmem:[#allocation3 + $0x58] sm:$0xff]
    %v128 = vld [vmem:[#allocation3 + $0x60] sm:$0xff]
    %v129 = vld [vmem:[#allocation3 + $0x68] sm:$0xff]
    %v130 = vld [vmem:[#allocation3 + $0x70] sm:$0xff]
    %v131 = vld [vmem:[#allocation3 + $0x78] sm:$0xff]
    %v132 = vld [vmem:[#allocation3 + $0x80] sm:$0xff]
    %v133 = vld [vmem:[#allocation3 + $0x88] sm:$0xff]
    %v134 = vld [vmem:[#allocation3 + $0x90] sm:$0xff]
    %v135 = vld [vmem:[#allocation3 + $0x98] sm:$0xff]
    %v136 = vld [vmem:[#allocation3 + $0xa0] sm:$0xff]
    %v137 = vld [vmem:[#allocation3 + $0xa8] sm:$0xff]
    %v138 = vld [vmem:[#allocation3 + $0xb0] sm:$0xff]
    %v139 = vld [vmem:[#allocation3 + $0xb8] sm:$0xff]
    %v140 = vld [vmem:[#allocation3 + $0xc0] sm:$0xff]
    %v141 = vld [vmem:[#allocation3 + $0xc8] sm:$0xff]
    %v142 = vld [vmem:[#allocation3 + $0xd0] sm:$0xff]
    %v143 = vld [vmem:[#allocation3 + $0xd8] sm:$0xff]
    %v144 = vld [vmem:[#allocation3 + $0xe0] sm:$0xff]
    %v145 = vld [vmem:[#allocation3 + $0xe8] sm:$0xff]
    %v146 = vld [vmem:[#allocation3 + $0xf0] sm:$0xff]
    %v147 = vld [vmem:[#allocation3 + $0xf8] sm:$0xff]
    %v148 = vld [vmem:[#allocation3 + $0x100] sm:$0xff]
    %v149 = vld [vmem:[#allocation3 + $0x108] sm:$0xff]
    %v150 = vld [vmem:[#allocation3 + $0x110] sm:$0xff]
    %v151 = vld [vmem:[#allocation3 + $0x118] sm:$0xff]
    %v152 = vld [vmem:[#allocation3 + $0x120] sm:$0xff]
    %v153 = vld [vmem:[#allocation3 + $0x128] sm:$0xff]
    %v154 = vld [vmem:[#allocation3 + $0x130] sm:$0xff]
    %v155 = vld [vmem:[#allocation3 + $0x138] sm:$0xff]
    %v156 = vld [vmem:[#allocation3 + $0x140] sm:$0xff]
    %v157 = vld [vmem:[#allocation3 + $0x148] sm:$0xff]
    %v158 = vld [vmem:[#allocation3 + $0x150] sm:$0xff]
    %v159 = vld [vmem:[#allocation3 + $0x158] sm:$0xff]
    %v160 = vld [vmem:[#allocation3 + $0x160] sm:$0xff]
    %v161 = vld [vmem:[#allocation3 + $0x168] sm:$0xff]
    %v162 = vld [vmem:[#allocation3 + $0x170] sm:$0xff]
    %v163 = vld [vmem:[#allocation3 + $0x178] sm:$0xff]
    %v164 = vld [vmem:[#allocation3 + $0x180] sm:$0xff]
    %v165 = vld [vmem:[#allocation3 + $0x188] sm:$0xff]
    %v166 = vld [vmem:[#allocation3 + $0x190] sm:$0xff]
    %v167 = vld [vmem:[#allocation3 + $0x198] sm:$0xff]
    %v168 = vld [vmem:[#allocation3 + $0x1a0] sm:$0xff]
    %v169 = vld [vmem:[#allocation3 + $0x1a8] sm:$0xff]
    %v170 = vld [vmem:[#allocation3 + $0x1b0] sm:$0xff]
    %v171 = vld [vmem:[#allocation3 + $0x1b8] sm:$0xff]
    %v172 = vld [vmem:[#allocation3 + $0x1c0] sm:$0xff]
    %v173 = vld [vmem:[#allocation3 + $0x1c8] sm:$0xff]
    %v174 = vld [vmem:[#allocation3 + $0x1d0] sm:$0xff]
    %v175 = vld [vmem:[#allocation3 + $0x1d8] sm:$0xff]
    %v176 = vld [vmem:[#allocation3 + $0x1e0] sm:$0xff]
    %v177 = vld [vmem:[#allocation3 + $0x1e8] sm:$0xff]
    %v178 = vld [vmem:[#allocation3 + $0x1f0] sm:$0xff]
    %v179 = vld [vmem:[#allocation3 + $0x1f8] sm:$0xff]
    %v180 = vld [vmem:[%s2] sm:$0x3]
    %v182 = vlaneseq
    %v183 = vshrl.u32 %v182, 7
    %v184 = vsub.s32 0, %v183
    %v185 = vrot.slane %v180, %v184
    %v186 = vlaneseq
    %v187 = vshrl.u32 %v186, 7
    %v188 = vsub.s32 1, %v187
    %v189 = vrot.slane %v180, %v188
    %192 = vmatprep.subr.mxu0 %v117
    %193 = vmatpush1.msra.mxu0 %v116
    %194 = vmatprep.subr.mxu0 %v119
    %195 = vmatpush1.msra.mxu0 %v118
    %196 = vmatprep.subr.mxu0 %v121
    %197 = vmatpush1.msra.mxu0 %v120
    %198 = vmatprep.subr.mxu0 %v123
    %199 = vmatpush1.msra.mxu0 %v122
    %200 = vmatprep.subr.mxu0 %v125
    %201 = vmatpush1.msra.mxu0 %v124
    %202 = vmatprep.subr.mxu0 %v127
    %203 = vmatpush1.msra.mxu0 %v126
    %204 = vmatprep.subr.mxu0 %v129
    %205 = vmatpush1.msra.mxu0 %v128
    %206 = vmatprep.subr.mxu0 %v131
    %207 = vmatpush1.msra.mxu0 %v130
    %208 = vmatprep.subr.mxu0 %v133
    %209 = vmatpush1.msra.mxu0 %v132
    %210 = vmatprep.subr.mxu0 %v135
    %211 = vmatpush1.msra.mxu0 %v134
    %212 = vmatprep.subr.mxu0 %v137
    %213 = vmatpush1.msra.mxu0 %v136
    %214 = vmatprep.subr.mxu0 %v139
    %215 = vmatpush1.msra.mxu0 %v138
    %216 = vmatprep.subr.mxu0 %v141
    %217 = vmatpush1.msra.mxu0 %v140
    %218 = vmatprep.subr.mxu0 %v143
    %219 = vmatpush1.msra.mxu0 %v142
    %220 = vmatprep.subr.mxu0 %v145
    %221 = vmatpush1.msra.mxu0 %v144
    %222 = vmatprep.subr.mxu0 %v147
    %223 = vmatpush1.msra.mxu0 %v146
    %224 = vmatprep.subr.mxu0 %v149
    %225 = vmatpush1.msra.mxu0 %v148
    %226 = vmatprep.subr.mxu0 %v151
    %227 = vmatpush1.msra.mxu0 %v150
    %228 = vmatprep.subr.mxu0 %v153
    %229 = vmatpush1.msra.mxu0 %v152
    %230 = vmatprep.subr.mxu0 %v155
    %231 = vmatpush1.msra.mxu0 %v154
    %232 = vmatprep.subr.mxu0 %v157
    %233 = vmatpush1.msra.mxu0 %v156
    %234 = vmatprep.subr.mxu0 %v159
    %235 = vmatpush1.msra.mxu0 %v158
    %236 = vmatprep.subr.mxu0 %v161
    %237 = vmatpush1.msra.mxu0 %v160
    %238 = vmatprep.subr.mxu0 %v163
    %239 = vmatpush1.msra.mxu0 %v162
    %240 = vmatprep.subr.mxu0 %v165
    %241 = vmatpush1.msra.mxu0 %v164
    %242 = vmatprep.subr.mxu0 %v167
    %243 = vmatpush1.msra.mxu0 %v166
    %244 = vmatprep.subr.mxu0 %v169
    %245 = vmatpush1.msra.mxu0 %v168
    %246 = vmatprep.subr.mxu0 %v171
    %247 = vmatpush1.msra.mxu0 %v170
    %248 = vmatprep.subr.mxu0 %v173
    %249 = vmatpush1.msra.mxu0 %v172
    %250 = vmatprep.subr.mxu0 %v175
    %251 = vmatpush1.msra.mxu0 %v174
    %252 = vmatprep.subr.mxu0 %v177
    %253 = vmatpush1.msra.mxu0 %v176
    %254 = vmatprep.subr.mxu0 %v179
    %255 = vmatpush1.msra.mxu0 %v178
    %256 = vmatprep.mubr.f32.mxu0 %v85
    %257 = vmatmul.mubr.f32.gmra.mrb[0].mxu0 %v84
    %v258 = vpop.f32.mrb[0].mxu0
    %v259 = vadd.f32 %v185, %v258
    %v260 = vpop.f32.mrb[0].mxu0
    %v261 = vadd.f32 %v189, %v260
    %262 = vmatprep.mubr.f32.mxu0 %v87
    %263 = vmatmul.mubr.f32.gmra.mrb[0].mxu0 %v86
    %v264 = vpop.f32.mrb[0].mxu0
    %v265 = vadd.f32 %v185, %v264
    %v266 = vpop.f32.mrb[0].mxu0
    %v267 = vadd.f32 %v189, %v266
    %268 = vmatprep.mubr.f32.mxu0 %v89
    %269 = vmatmul.mubr.f32.gmra.mrb[0].mxu0 %v88
    %v270 = vpop.f32.mrb[0].mxu0
    %v271 = vadd.f32 %v185, %v270
    %v272 = vpop.f32.mrb[0].mxu0
    %v273 = vadd.f32 %v189, %v272
    %274 = vmatprep.mubr.f32.mxu0 %v91
    %275 = vmatmul.mubr.f32.gmra.mrb[0].mxu0 %v90
    %v276 = vpop.f32.mrb[0].mxu0
    %v277 = vadd.f32 %v185, %v276
    %v278 = vpop.f32.mrb[0].mxu0
    %v279 = vadd.f32 %v189, %v278
    %280 = vmatprep.mubr.f32.mxu0 %v93
    %281 = vmatmul.mubr.f32.gmra.mrb[0].mxu0 %v92
    %v282 = vpop.f32.mrb[0].mxu0
    %v283 = vadd.f32 %v185, %v282
    %v284 = vpop.f32.mrb[0].mxu0
    %v285 = vadd.f32 %v189, %v284
    %286 = vmatprep.mubr.f32.mxu0 %v95
    %287 = vmatmul.mubr.f32.gmra.mrb[0].mxu0 %v94
    %v288 = vpop.f32.mrb[0].mxu0
    %v289 = vadd.f32 %v185, %v288
    %v290 = vpop.f32.mrb[0].mxu0
    %v291 = vadd.f32 %v189, %v290
    %292 = vmatprep.mubr.f32.mxu0 %v97
    %293 = vmatmul.mubr.f32.gmra.mrb[0].mxu0 %v96
    %v294 = vpop.f32.mrb[0].mxu0
    %v295 = vadd.f32 %v185, %v294
    %v296 = vpop.f32.mrb[0].mxu0
    %v297 = vadd.f32 %v189, %v296
    %298 = vmatprep.mubr.f32.mxu0 %v99
    %299 = vmatmul.mubr.f32.gmra.mrb[0].mxu0 %v98
    %v300 = vpop.f32.mrb[0].mxu0
    %v301 = vadd.f32 %v185, %v300
    %v302 = vpop.f32.mrb[0].mxu0
    %v303 = vadd.f32 %v189, %v302
    %304 = vmatprep.mubr.f32.mxu0 %v101
    %305 = vmatmul.mubr.f32.gmra.mrb[0].mxu0 %v100
    %v306 = vpop.f32.mrb[0].mxu0
    %v307 = vadd.f32 %v185, %v306
    %v308 = vpop.f32.mrb[0].mxu0
    %v309 = vadd.f32 %v189, %v308
    %310 = vmatprep.mubr.f32.mxu0 %v103
    %311 = vmatmul.mubr.f32.gmra.mrb[0].mxu0 %v102
    %v312 = vpop.f32.mrb[0].mxu0
    %v313 = vadd.f32 %v185, %v312
    %v314 = vpop.f32.mrb[0].mxu0
    %v315 = vadd.f32 %v189, %v314
    %316 = vmatprep.mubr.f32.mxu0 %v105
    %317 = vmatmul.mubr.f32.gmra.mrb[0].mxu0 %v104
    %v318 = vpop.f32.mrb[0].mxu0
    %v319 = vadd.f32 %v185, %v318
    %v320 = vpop.f32.mrb[0].mxu0
    %v321 = vadd.f32 %v189, %v320
    %322 = vmatprep.mubr.f32.mxu0 %v107
    %323 = vmatmul.mubr.f32.gmra.mrb[0].mxu0 %v106
    %v324 = vpop.f32.mrb[0].mxu0
    %v325 = vadd.f32 %v185, %v324
    %v326 = vpop.f32.mrb[0].mxu0
    %v327 = vadd.f32 %v189, %v326
    %328 = vmatprep.mubr.f32.mxu0 %v109
    %329 = vmatmul.mubr.f32.gmra.mrb[0].mxu0 %v108
    %v330 = vpop.f32.mrb[0].mxu0
    %v331 = vadd.f32 %v185, %v330
    %v332 = vpop.f32.mrb[0].mxu0
    %v333 = vadd.f32 %v189, %v332
    %334 = vmatprep.mubr.f32.mxu0 %v111
    %335 = vmatmul.mubr.f32.gmra.mrb[0].mxu0 %v110
    %v336 = vpop.f32.mrb[0].mxu0
    %v337 = vadd.f32 %v185, %v336
    %v338 = vpop.f32.mrb[0].mxu0
    %v339 = vadd.f32 %v189, %v338
    %340 = vmatprep.mubr.f32.mxu0 %v113
    %341 = vmatmul.mubr.f32.gmra.mrb[0].mxu0 %v112
    %v342 = vpop.f32.mrb[0].mxu0
    %v343 = vadd.f32 %v185, %v342
    %v344 = vpop.f32.mrb[0].mxu0
    %v345 = vadd.f32 %v189, %v344
    %346 = vmatprep.mubr.f32.mxu0 %v115
    %347 = vmatmul.mubr.f32.gmra.mrb[0].mxu0 %v114
    %v348 = vpop.f32.mrb[0].mxu0
    %v349 = vadd.f32 %v185, %v348
    %v350 = vpop.f32.mrb[0].mxu0
    %v351 = vadd.f32 %v189, %v350
    %352 = vdwg.mxu0
    %v353 = vmax.f32 %v259, 0.0
    %v354 = vmax.f32 %v261, 0.0
    %v355 = vmax.f32 %v265, 0.0
    %v356 = vmax.f32 %v267, 0.0
    %v357 = vmax.f32 %v271, 0.0
    %v358 = vmax.f32 %v273, 0.0
    %v359 = vmax.f32 %v277, 0.0
    %v360 = vmax.f32 %v279, 0.0
    %v361 = vmax.f32 %v283, 0.0
    %v362 = vmax.f32 %v285, 0.0
    %v363 = vmax.f32 %v289, 0.0
    %v364 = vmax.f32 %v291, 0.0
    %v365 = vmax.f32 %v295, 0.0
    %v366 = vmax.f32 %v297, 0.0
    %v367 = vmax.f32 %v301, 0.0
    %v368 = vmax.f32 %v303, 0.0
    %v369 = vmax.f32 %v307, 0.0
    %v370 = vmax.f32 %v309, 0.0
    %v371 = vmax.f32 %v313, 0.0
    %v372 = vmax.f32 %v315, 0.0
    %v373 = vmax.f32 %v319, 0.0
    %v374 = vmax.f32 %v321, 0.0
    %v375 = vmax.f32 %v325, 0.0
    %v376 = vmax.f32 %v327, 0.0
    %v377 = vmax.f32 %v331, 0.0
    %v378 = vmax.f32 %v333, 0.0
    %v379 = vmax.f32 %v337, 0.0
    %v380 = vmax.f32 %v339, 0.0
    %v381 = vmax.f32 %v343, 0.0
    %v382 = vmax.f32 %v345, 0.0
    %v383 = vmax.f32 %v349, 0.0
    %v384 = vmax.f32 %v351, 0.0
    %v385 = vld [vmem:[#allocation2] sm:$0xff]
    %v386 = vld [vmem:[#allocation2 + $0x8] sm:$0xff]
    %v387 = vld [vmem:[#allocation2 + $0x10] sm:$0xff]
    %v388 = vld [vmem:[#allocation2 + $0x18] sm:$0xff]
    %v389 = vld [vmem:[#allocation2 + $0x20] sm:$0xff]
    %v390 = vld [vmem:[#allocation2 + $0x28] sm:$0xff]
    %v391 = vld [vmem:[#allocation2 + $0x30] sm:$0xff]
    %v392 = vld [vmem:[#allocation2 + $0x38] sm:$0xff]
    %v393 = vld [vmem:[#allocation2 + $0x40] sm:$0xff]
    %v394 = vld [vmem:[#allocation2 + $0x48] sm:$0xff]
    %v395 = vld [vmem:[#allocation2 + $0x50] sm:$0xff]
    %v396 = vld [vmem:[#allocation2 + $0x58] sm:$0xff]
    %v397 = vld [vmem:[#allocation2 + $0x60] sm:$0xff]
    %v398 = vld [vmem:[#allocation2 + $0x68] sm:$0xff]
    %v399 = vld [vmem:[#allocation2 + $0x70] sm:$0xff]
    %v400 = vld [vmem:[#allocation2 + $0x78] sm:$0xff]
    %v401 = vld [vmem:[#allocation2 + $0x80] sm:$0xff]
    %v402 = vld [vmem:[#allocation2 + $0x88] sm:$0xff]
    %v403 = vld [vmem:[#allocation2 + $0x90] sm:$0xff]
    %v404 = vld [vmem:[#allocation2 + $0x98] sm:$0xff]
    %v405 = vld [vmem:[#allocation2 + $0xa0] sm:$0xff]
    %v406 = vld [vmem:[#allocation2 + $0xa8] sm:$0xff]
    %v407 = vld [vmem:[#allocation2 + $0xb0] sm:$0xff]
    %v408 = vld [vmem:[#allocation2 + $0xb8] sm:$0xff]
    %v409 = vld [vmem:[#allocation2 + $0xc0] sm:$0xff]
    %v410 = vld [vmem:[#allocation2 + $0xc8] sm:$0xff]
    %v411 = vld [vmem:[#allocation2 + $0xd0] sm:$0xff]
    %v412 = vld [vmem:[#allocation2 + $0xd8] sm:$0xff]
    %v413 = vld [vmem:[#allocation2 + $0xe0] sm:$0xff]
    %v414 = vld [vmem:[#allocation2 + $0xe8] sm:$0xff]
    %v415 = vld [vmem:[#allocation2 + $0xf0] sm:$0xff]
    %v416 = vld [vmem:[#allocation2 + $0xf8] sm:$0xff]
    %v417 = vld [vmem:[#allocation5] sm:$0xff]
    %v418 = vld [vmem:[#allocation5 + $0x8] sm:$0xff]
    %v419 = vld [vmem:[#allocation5 + $0x10] sm:$0xff]
    %v420 = vld [vmem:[#allocation5 + $0x18] sm:$0xff]
    %v421 = vld [vmem:[#allocation5 + $0x20] sm:$0xff]
    %v422 = vld [vmem:[#allocation5 + $0x28] sm:$0xff]
    %v423 = vld [vmem:[#allocation5 + $0x30] sm:$0xff]
    %v424 = vld [vmem:[#allocation5 + $0x38] sm:$0xff]
    %v425 = vld [vmem:[#allocation5 + $0x40] sm:$0xff]
    %v426 = vld [vmem:[#allocation5 + $0x48] sm:$0xff]
    %v427 = vld [vmem:[#allocation5 + $0x50] sm:$0xff]
    %v428 = vld [vmem:[#allocation5 + $0x58] sm:$0xff]
    %v429 = vld [vmem:[#allocation5 + $0x60] sm:$0xff]
    %v430 = vld [vmem:[#allocation5 + $0x68] sm:$0xff]
    %v431 = vld [vmem:[#allocation5 + $0x70] sm:$0xff]
    %v432 = vld [vmem:[#allocation5 + $0x78] sm:$0xff]
    %v433 = vld [vmem:[#allocation5 + $0x80] sm:$0xff]
    %v434 = vld [vmem:[#allocation5 + $0x88] sm:$0xff]
    %v435 = vld [vmem:[#allocation5 + $0x90] sm:$0xff]
    %v436 = vld [vmem:[#allocation5 + $0x98] sm:$0xff]
    %v437 = vld [vmem:[#allocation5 + $0xa0] sm:$0xff]
    %v438 = vld [vmem:[#allocation5 + $0xa8] sm:$0xff]
    %v439 = vld [vmem:[#allocation5 + $0xb0] sm:$0xff]
    %v440 = vld [vmem:[#allocation5 + $0xb8] sm:$0xff]
    %v441 = vld [vmem:[#allocation5 + $0xc0] sm:$0xff]
    %v442 = vld [vmem:[#allocation5 + $0xc8] sm:$0xff]
    %v443 = vld [vmem:[#allocation5 + $0xd0] sm:$0xff]
    %v444 = vld [vmem:[#allocation5 + $0xd8] sm:$0xff]
    %v445 = vld [vmem:[#allocation5 + $0xe0] sm:$0xff]
    %v446 = vld [vmem:[#allocation5 + $0xe8] sm:$0xff]
    %v447 = vld [vmem:[#allocation5 + $0xf0] sm:$0xff]
    %v448 = vld [vmem:[#allocation5 + $0xf8] sm:$0xff]
    %v449 = vld [vmem:[#allocation5 + $0x100] sm:$0xff]
    %v450 = vld [vmem:[#allocation5 + $0x108] sm:$0xff]
    %v451 = vld [vmem:[#allocation5 + $0x110] sm:$0xff]
    %v452 = vld [vmem:[#allocation5 + $0x118] sm:$0xff]
    %v453 = vld [vmem:[#allocation5 + $0x120] sm:$0xff]
    %v454 = vld [vmem:[#allocation5 + $0x128] sm:$0xff]
    %v455 = vld [vmem:[#allocation5 + $0x130] sm:$0xff]
    %v456 = vld [vmem:[#allocation5 + $0x138] sm:$0xff]
    %v457 = vld [vmem:[#allocation5 + $0x140] sm:$0xff]
    %v458 = vld [vmem:[#allocation5 + $0x148] sm:$0xff]
    %v459 = vld [vmem:[#allocation5 + $0x150] sm:$0xff]
    %v460 = vld [vmem:[#allocation5 + $0x158] sm:$0xff]
    %v461 = vld [vmem:[#allocation5 + $0x160] sm:$0xff]
    %v462 = vld [vmem:[#allocation5 + $0x168] sm:$0xff]
    %v463 = vld [vmem:[#allocation5 + $0x170] sm:$0xff]
    %v464 = vld [vmem:[#allocation5 + $0x178] sm:$0xff]
    %v465 = vld [vmem:[#allocation5 + $0x180] sm:$0xff]
    %v466 = vld [vmem:[#allocation5 + $0x188] sm:$0xff]
    %v467 = vld [vmem:[#allocation5 + $0x190] sm:$0xff]
    %v468 = vld [vmem:[#allocation5 + $0x198] sm:$0xff]
    %v469 = vld [vmem:[#allocation5 + $0x1a0] sm:$0xff]
    %v470 = vld [vmem:[#allocation5 + $0x1a8] sm:$0xff]
    %v471 = vld [vmem:[#allocation5 + $0x1b0] sm:$0xff]
    %v472 = vld [vmem:[#allocation5 + $0x1b8] sm:$0xff]
    %v473 = vld [vmem:[#allocation5 + $0x1c0] sm:$0xff]
    %v474 = vld [vmem:[#allocation5 + $0x1c8] sm:$0xff]
    %v475 = vld [vmem:[#allocation5 + $0x1d0] sm:$0xff]
    %v476 = vld [vmem:[#allocation5 + $0x1d8] sm:$0xff]
    %v477 = vld [vmem:[#allocation5 + $0x1e0] sm:$0xff]
    %v478 = vld [vmem:[#allocation5 + $0x1e8] sm:$0xff]
    %v479 = vld [vmem:[#allocation5 + $0x1f0] sm:$0xff]
    %v480 = vld [vmem:[#allocation5 + $0x1f8] sm:$0xff]
    %481 = vmatprep.subr.mxu0 %v418
    %482 = vmatpush1.msra.mxu0 %v417
    %483 = vmatprep.subr.mxu0 %v420
    %484 = vmatpush1.msra.mxu0 %v419
    %485 = vmatprep.subr.mxu0 %v422
    %486 = vmatpush1.msra.mxu0 %v421
    %487 = vmatprep.subr.mxu0 %v424
    %488 = vmatpush1.msra.mxu0 %v423
    %489 = vmatprep.subr.mxu0 %v426
    %490 = vmatpush1.msra.mxu0 %v425
    %491 = vmatprep.subr.mxu0 %v428
    %492 = vmatpush1.msra.mxu0 %v427
    %493 = vmatprep.subr.mxu0 %v430
    %494 = vmatpush1.msra.mxu0 %v429
    %495 = vmatprep.subr.mxu0 %v432
    %496 = vmatpush1.msra.mxu0 %v431
    %497 = vmatprep.subr.mxu0 %v434
    %498 = vmatpush1.msra.mxu0 %v433
    %499 = vmatprep.subr.mxu0 %v436
    %500 = vmatpush1.msra.mxu0 %v435
    %501 = vmatprep.subr.mxu0 %v438
    %502 = vmatpush1.msra.mxu0 %v437
    %503 = vmatprep.subr.mxu0 %v440
    %504 = vmatpush1.msra.mxu0 %v439
    %505 = vmatprep.subr.mxu0 %v442
    %506 = vmatpush1.msra.mxu0 %v441
    %507 = vmatprep.subr.mxu0 %v444
    %508 = vmatpush1.msra.mxu0 %v443
    %509 = vmatprep.subr.mxu0 %v446
    %510 = vmatpush1.msra.mxu0 %v445
    %511 = vmatprep.subr.mxu0 %v448
    %512 = vmatpush1.msra.mxu0 %v447
    %513 = vmatprep.subr.mxu0 %v450
    %514 = vmatpush1.msra.mxu0 %v449
    %515 = vmatprep.subr.mxu0 %v452
    %516 = vmatpush1.msra.mxu0 %v451
    %517 = vmatprep.subr.mxu0 %v454
    %518 = vmatpush1.msra.mxu0 %v453
    %519 = vmatprep.subr.mxu0 %v456
    %520 = vmatpush1.msra.mxu0 %v455
    %521 = vmatprep.subr.mxu0 %v458
    %522 = vmatpush1.msra.mxu0 %v457
    %523 = vmatprep.subr.mxu0 %v460
    %524 = vmatpush1.msra.mxu0 %v459
    %525 = vmatprep.subr.mxu0 %v462
    %526 = vmatpush1.msra.mxu0 %v461
    %527 = vmatprep.subr.mxu0 %v464
    %528 = vmatpush1.msra.mxu0 %v463
    %529 = vmatprep.subr.mxu0 %v466
    %530 = vmatpush1.msra.mxu0 %v465
    %531 = vmatprep.subr.mxu0 %v468
    %532 = vmatpush1.msra.mxu0 %v467
    %533 = vmatprep.subr.mxu0 %v470
    %534 = vmatpush1.msra.mxu0 %v469
    %535 = vmatprep.subr.mxu0 %v472
    %536 = vmatpush1.msra.mxu0 %v471
    %537 = vmatprep.subr.mxu0 %v474
    %538 = vmatpush1.msra.mxu0 %v473
    %539 = vmatprep.subr.mxu0 %v476
    %540 = vmatpush1.msra.mxu0 %v475
    %541 = vmatprep.subr.mxu0 %v478
    %542 = vmatpush1.msra.mxu0 %v477
    %543 = vmatprep.subr.mxu0 %v480
    %544 = vmatpush1.msra.mxu0 %v479
    %545 = vmatprep.mubr.f32.mxu0 %v354
    %546 = vmatmul.mubr.f32.gmra.mrb[0].mxu0 %v353
    %v547 = vpop.f32.mrb[0].mxu0
    %v548 = vadd.f32 0.0, %v547
    %v549 = vpop.f32.mrb[0].mxu0
    %v550 = vadd.f32 0.0, %v549
    %551 = vmatprep.mubr.f32.mxu0 %v356
    %552 = vmatmul.mubr.f32.gmra.mrb[0].mxu0 %v355
    %v553 = vpop.f32.mrb[0].mxu0
    %v554 = vadd.f32 0.0, %v553
    %v555 = vpop.f32.mrb[0].mxu0
    %v556 = vadd.f32 0.0, %v555
    %557 = vmatprep.mubr.f32.mxu0 %v358
    %558 = vmatmul.mubr.f32.gmra.mrb[0].mxu0 %v357
    %v559 = vpop.f32.mrb[0].mxu0
    %v560 = vadd.f32 0.0, %v559
    %v561 = vpop.f32.mrb[0].mxu0
    %v562 = vadd.f32 0.0, %v561
    %563 = vmatprep.mubr.f32.mxu0 %v360
    %564 = vmatmul.mubr.f32.gmra.mrb[0].mxu0 %v359
    %v565 = vpop.f32.mrb[0].mxu0
    %v566 = vadd.f32 0.0, %v565
    %v567 = vpop.f32.mrb[0].mxu0
    %v568 = vadd.f32 0.0, %v567
    %569 = vmatprep.mubr.f32.mxu0 %v362
    %570 = vmatmul.mubr.f32.gmra.mrb[0].mxu0 %v361
    %v571 = vpop.f32.mrb[0].mxu0
    %v572 = vadd.f32 0.0, %v571
    %v573 = vpop.f32.mrb[0].mxu0
    %v574 = vadd.f32 0.0, %v573
    %575 = vmatprep.mubr.f32.mxu0 %v364
    %576 = vmatmul.mubr.f32.gmra.mrb[0].mxu0 %v363
    %v577 = vpop.f32.mrb[0].mxu0
    %v578 = vadd.f32 0.0, %v577
    %v579 = vpop.f32.mrb[0].mxu0
    %v580 = vadd.f32 0.0, %v579
    %581 = vmatprep.mubr.f32.mxu0 %v366
    %582 = vmatmul.mubr.f32.gmra.mrb[0].mxu0 %v365
    %v583 = vpop.f32.mrb[0].mxu0
    %v584 = vadd.f32 0.0, %v583
    %v585 = vpop.f32.mrb[0].mxu0
    %v586 = vadd.f32 0.0, %v585
    %587 = vmatprep.mubr.f32.mxu0 %v368
    %588 = vmatmul.mubr.f32.gmra.mrb[0].mxu0 %v367
    %v589 = vpop.f32.mrb[0].mxu0
    %v590 = vadd.f32 0.0, %v589
    %v591 = vpop.f32.mrb[0].mxu0
    %v592 = vadd.f32 0.0, %v591
    %593 = vmatprep.mubr.f32.mxu0 %v370
    %594 = vmatmul.mubr.f32.gmra.mrb[0].mxu0 %v369
    %v595 = vpop.f32.mrb[0].mxu0
    %v596 = vadd.f32 0.0, %v595
    %v597 = vpop.f32.mrb[0].mxu0
    %v598 = vadd.f32 0.0, %v597
    %599 = vmatprep.mubr.f32.mxu0 %v372
    %600 = vmatmul.mubr.f32.gmra.mrb[0].mxu0 %v371
    %v601 = vpop.f32.mrb[0].mxu0
    %v602 = vadd.f32 0.0, %v601
    %v603 = vpop.f32.mrb[0].mxu0
    %v604 = vadd.f32 0.0, %v603
    %605 = vmatprep.mubr.f32.mxu0 %v374
    %606 = vmatmul.mubr.f32.gmra.mrb[0].mxu0 %v373
    %v607 = vpop.f32.mrb[0].mxu0
    %v608 = vadd.f32 0.0, %v607
    %v609 = vpop.f32.mrb[0].mxu0
    %v610 = vadd.f32 0.0, %v609
    %611 = vmatprep.mubr.f32.mxu0 %v376
    %612 = vmatmul.mubr.f32.gmra.mrb[0].mxu0 %v375
    %v613 = vpop.f32.mrb[0].mxu0
    %v614 = vadd.f32 0.0, %v613
    %v615 = vpop.f32.mrb[0].mxu0
    %v616 = vadd.f32 0.0, %v615
    %617 = vmatprep.mubr.f32.mxu0 %v378
    %618 = vmatmul.mubr.f32.gmra.mrb[0].mxu0 %v377
    %v619 = vpop.f32.mrb[0].mxu0
    %v620 = vadd.f32 0.0, %v619
    %v621 = vpop.f32.mrb[0].mxu0
    %v622 = vadd.f32 0.0, %v621
    %623 = vmatprep.mubr.f32.mxu0 %v380
    %624 = vmatmul.mubr.f32.gmra.mrb[0].mxu0 %v379
    %v625 = vpop.f32.mrb[0].mxu0
    %v626 = vadd.f32 0.0, %v625
    %v627 = vpop.f32.mrb[0].mxu0
    %v628 = vadd.f32 0.0, %v627
    %629 = vmatprep.mubr.f32.mxu0 %v382
    %630 = vmatmul.mubr.f32.gmra.mrb[0].mxu0 %v381
    %v631 = vpop.f32.mrb[0].mxu0
    %v632 = vadd.f32 0.0, %v631
    %v633 = vpop.f32.mrb[0].mxu0
    %v634 = vadd.f32 0.0, %v633
    %635 = vmatprep.mubr.f32.mxu0 %v384
    %636 = vmatmul.mubr.f32.gmra.mrb[0].mxu0 %v383
    %v637 = vpop.f32.mrb[0].mxu0
    %v638 = vadd.f32 0.0, %v637
    %v639 = vpop.f32.mrb[0].mxu0
    %v640 = vadd.f32 0.0, %v639
    %641 = vdwg.mxu0
    %v642 = vadd.f32 %v385, %v548
    %v643 = vadd.f32 %v386, %v550
    %v644 = vadd.f32 %v387, %v554
    %v645 = vadd.f32 %v388, %v556
    %v646 = vadd.f32 %v389, %v560
    %v647 = vadd.f32 %v390, %v562
    %v648 = vadd.f32 %v391, %v566
    %v649 = vadd.f32 %v392, %v568
    %v650 = vadd.f32 %v393, %v572
    %v651 = vadd.f32 %v394, %v574
    %v652 = vadd.f32 %v395, %v578
    %v653 = vadd.f32 %v396, %v580
    %v654 = vadd.f32 %v397, %v584
    %v655 = vadd.f32 %v398, %v586
    %v656 = vadd.f32 %v399, %v590
    %v657 = vadd.f32 %v400, %v592
    %v658 = vadd.f32 %v401, %v596
    %v659 = vadd.f32 %v402, %v598
    %v660 = vadd.f32 %v403, %v602
    %v661 = vadd.f32 %v404, %v604
    %v662 = vadd.f32 %v405, %v608
    %v663 = vadd.f32 %v406, %v610
    %v664 = vadd.f32 %v407, %v614
    %v665 = vadd.f32 %v408, %v616
    %v666 = vadd.f32 %v409, %v620
    %v667 = vadd.f32 %v410, %v622
    %v668 = vadd.f32 %v411, %v626
    %v669 = vadd.f32 %v412, %v628
    %v670 = vadd.f32 %v413, %v632
    %v671 = vadd.f32 %v414, %v634
    %v672 = vadd.f32 %v415, %v638
    %v673 = vadd.f32 %v416, %v640
    %674 = vst [vmem:[#allocation2] sm:$0xff] %v642
    %675 = vst [vmem:[#allocation2 + $0x8] sm:$0xff] %v643
    %676 = vst [vmem:[#allocation2 + $0x10] sm:$0xff] %v644
    %677 = vst [vmem:[#allocation2 + $0x18] sm:$0xff] %v645
    %678 = vst [vmem:[#allocation2 + $0x20] sm:$0xff] %v646
    %679 = vst [vmem:[#allocation2 + $0x28] sm:$0xff] %v647
    %680 = vst [vmem:[#allocation2 + $0x30] sm:$0xff] %v648
    %681 = vst [vmem:[#allocation2 + $0x38] sm:$0xff] %v649
    %682 = vst [vmem:[#allocation2 + $0x40] sm:$0xff] %v650
    %683 = vst [vmem:[#allocation2 + $0x48] sm:$0xff] %v651
    %684 = vst [vmem:[#allocation2 + $0x50] sm:$0xff] %v652
    %685 = vst [vmem:[#allocation2 + $0x58] sm:$0xff] %v653
    %686 = vst [vmem:[#allocation2 + $0x60] sm:$0xff] %v654
    %687 = vst [vmem:[#allocation2 + $0x68] sm:$0xff] %v655
    %688 = vst [vmem:[#allocation2 + $0x70] sm:$0xff] %v656
    %689 = vst [vmem:[#allocation2 + $0x78] sm:$0xff] %v657
    %690 = vst [vmem:[#allocation2 + $0x80] sm:$0xff] %v658
    %691 = vst [vmem:[#allocation2 + $0x88] sm:$0xff] %v659
    %692 = vst [vmem:[#allocation2 + $0x90] sm:$0xff] %v660
    %693 = vst [vmem:[#allocation2 + $0x98] sm:$0xff] %v661
    %694 = vst [vmem:[#allocation2 + $0xa0] sm:$0xff] %v662
    %695 = vst [vmem:[#allocation2 + $0xa8] sm:$0xff] %v663
    %696 = vst [vmem:[#allocation2 + $0xb0] sm:$0xff] %v664
    %697 = vst [vmem:[#allocation2 + $0xb8] sm:$0xff] %v665
    %698 = vst [vmem:[#allocation2 + $0xc0] sm:$0xff] %v666
    %699 = vst [vmem:[#allocation2 + $0xc8] sm:$0xff] %v667
    %700 = vst [vmem:[#allocation2 + $0xd0] sm:$0xff] %v668
    %701 = vst [vmem:[#allocation2 + $0xd8] sm:$0xff] %v669
    %702 = vst [vmem:[#allocation2 + $0xe0] sm:$0xff] %v670
    %703 = vst [vmem:[#allocation2 + $0xe8] sm:$0xff] %v671
    %704 = vst [vmem:[#allocation2 + $0xf0] sm:$0xff] %v672
    %705 = vst [vmem:[#allocation2 + $0xf8] sm:$0xff] %v673
    // Predicated region
    $region34: #{forward.1} parent=1 // pred_check
      %p706 = pneg %p48
    $region35: #{forward.1} parent=1 // pred_check_branch
      %708 = sbr.rel (%p706) target = $region37
    $region36: #{forward.1} parent=1 // pred_region
      %v709 = vld [vmem:[#allocation2] sm:$0xff]
      %v710 = vld [vmem:[#allocation2 + $0x8] sm:$0xff]
      %v711 = vld [vmem:[#allocation2 + $0x10] sm:$0xff]
      %v712 = vld [vmem:[#allocation2 + $0x18] sm:$0xff]
      %v713 = vld [vmem:[#allocation2 + $0x20] sm:$0xff]
      %v714 = vld [vmem:[#allocation2 + $0x28] sm:$0xff]
      %v715 = vld [vmem:[#allocation2 + $0x30] sm:$0xff]
      %v716 = vld [vmem:[#allocation2 + $0x38] sm:$0xff]
      %v717 = vld [vmem:[#allocation2 + $0x40] sm:$0xff]
      %v718 = vld [vmem:[#allocation2 + $0x48] sm:$0xff]
      %v719 = vld [vmem:[#allocation2 + $0x50] sm:$0xff]
      %v720 = vld [vmem:[#allocation2 + $0x58] sm:$0xff]
      %v721 = vld [vmem:[#allocation2 + $0x60] sm:$0xff]
      %v722 = vld [vmem:[#allocation2 + $0x68] sm:$0xff]
      %v723 = vld [vmem:[#allocation2 + $0x70] sm:$0xff]
      %v724 = vld [vmem:[#allocation2 + $0x78] sm:$0xff]
      %v725 = vld [vmem:[#allocation2 + $0x80] sm:$0xff]
      %v726 = vld [vmem:[#allocation2 + $0x88] sm:$0xff]
      %v727 = vld [vmem:[#allocation2 + $0x90] sm:$0xff]
      %v728 = vld [vmem:[#allocation2 + $0x98] sm:$0xff]
      %v729 = vld [vmem:[#allocation2 + $0xa0] sm:$0xff]
      %v730 = vld [vmem:[#allocation2 + $0xa8] sm:$0xff]
      %v731 = vld [vmem:[#allocation2 + $0xb0] sm:$0xff]
      %v732 = vld [vmem:[#allocation2 + $0xb8] sm:$0xff]
      %v733 = vld [vmem:[#allocation2 + $0xc0] sm:$0xff]
      %v734 = vld [vmem:[#allocation2 + $0xc8] sm:$0xff]
      %v735 = vld [vmem:[#allocation2 + $0xd0] sm:$0xff]
      %v736 = vld [vmem:[#allocation2 + $0xd8] sm:$0xff]
      %v737 = vld [vmem:[#allocation2 + $0xe0] sm:$0xff]
      %v738 = vld [vmem:[#allocation2 + $0xe8] sm:$0xff]
      %v739 = vld [vmem:[#allocation2 + $0xf0] sm:$0xff]
      %v740 = vld [vmem:[#allocation2 + $0xf8] sm:$0xff]
      %v741 = vld [vmem:[%s4] sm:$0x3]
      %v743 = vlaneseq
      %v744 = vshrl.u32 %v743, 7
      %v745 = vsub.s32 0, %v744
      %v746 = vrot.slane %v741, %v745
      %v747 = vlaneseq
      %v748 = vshrl.u32 %v747, 7
      %v749 = vsub.s32 1, %v748
      %v750 = vrot.slane %v741, %v749
      %v753 = vadd.f32 %v709, %v746
      %v754 = vadd.f32 %v710, %v750
      %v755 = vadd.f32 %v711, %v746
      %v756 = vadd.f32 %v712, %v750
      %v757 = vadd.f32 %v713, %v746
      %v758 = vadd.f32 %v714, %v750
      %v759 = vadd.f32 %v715, %v746
      %v760 = vadd.f32 %v716, %v750
      %v761 = vadd.f32 %v717, %v746
      %v762 = vadd.f32 %v718, %v750
      %v763 = vadd.f32 %v719, %v746
      %v764 = vadd.f32 %v720, %v750
      %v765 = vadd.f32 %v721, %v746
      %v766 = vadd.f32 %v722, %v750
      %v767 = vadd.f32 %v723, %v746
      %v768 = vadd.f32 %v724, %v750
      %v769 = vadd.f32 %v725, %v746
      %v770 = vadd.f32 %v726, %v750
      %v771 = vadd.f32 %v727, %v746
      %v772 = vadd.f32 %v728, %v750
      %v773 = vadd.f32 %v729, %v746
      %v774 = vadd.f32 %v730, %v750
      %v775 = vadd.f32 %v731, %v746
      %v776 = vadd.f32 %v732, %v750
      %v777 = vadd.f32 %v733, %v746
      %v778 = vadd.f32 %v734, %v750
      %v779 = vadd.f32 %v735, %v746
      %v780 = vadd.f32 %v736, %v750
      %v781 = vadd.f32 %v737, %v746
      %v782 = vadd.f32 %v738, %v750
      %v783 = vadd.f32 %v739, %v746
      %v784 = vadd.f32 %v740, %v750
      %785 = vst [vmem:[%s5] sm:$0xff] %v753
      %786 = vst [vmem:[%s5 + $0x8] sm:$0xff] %v754
      %787 = vst [vmem:[%s5 + $0x10] sm:$0xff] %v755
      %788 = vst [vmem:[%s5 + $0x18] sm:$0xff] %v756
      %789 = vst [vmem:[%s5 + $0x20] sm:$0xff] %v757
      %790 = vst [vmem:[%s5 + $0x28] sm:$0xff] %v758
      %791 = vst [vmem:[%s5 + $0x30] sm:$0xff] %v759
      %792 = vst [vmem:[%s5 + $0x38] sm:$0xff] %v760
      %793 = vst [vmem:[%s5 + $0x40] sm:$0xff] %v761
      %794 = vst [vmem:[%s5 + $0x48] sm:$0xff] %v762
      %795 = vst [vmem:[%s5 + $0x50] sm:$0xff] %v763
      %796 = vst [vmem:[%s5 + $0x58] sm:$0xff] %v764
      %797 = vst [vmem:[%s5 + $0x60] sm:$0xff] %v765
      %798 = vst [vmem:[%s5 + $0x68] sm:$0xff] %v766
      %799 = vst [vmem:[%s5 + $0x70] sm:$0xff] %v767
      %800 = vst [vmem:[%s5 + $0x78] sm:$0xff] %v768
      %801 = vst [vmem:[%s5 + $0x80] sm:$0xff] %v769
      %802 = vst [vmem:[%s5 + $0x88] sm:$0xff] %v770
      %803 = vst [vmem:[%s5 + $0x90] sm:$0xff] %v771
      %804 = vst [vmem:[%s5 + $0x98] sm:$0xff] %v772
      %805 = vst [vmem:[%s5 + $0xa0] sm:$0xff] %v773
      %806 = vst [vmem:[%s5 + $0xa8] sm:$0xff] %v774
      %807 = vst [vmem:[%s5 + $0xb0] sm:$0xff] %v775
      %808 = vst [vmem:[%s5 + $0xb8] sm:$0xff] %v776
      %809 = vst [vmem:[%s5 + $0xc0] sm:$0xff] %v777
      %810 = vst [vmem:[%s5 + $0xc8] sm:$0xff] %v778
      %811 = vst [vmem:[%s5 + $0xd0] sm:$0xff] %v779
      %812 = vst [vmem:[%s5 + $0xd8] sm:$0xff] %v780
      %813 = vst [vmem:[%s5 + $0xe0] sm:$0xff] %v781
      %814 = vst [vmem:[%s5 + $0xe8] sm:$0xff] %v782
      %815 = vst [vmem:[%s5 + $0xf0] sm:$0xff] %v783
      %816 = vst [vmem:[%s5 + $0xf8] sm:$0xff] %v784
    $region37: #{forward.1} parent=1 // pred_fallthru
      _
    // Predicated region
    $region38: #{forward.1} parent=1 // pred_check
      _
    $region39: #{forward.1} parent=1 // pred_check_branch
      %818 = sbr.rel (0) target = $region41
    $region40: #{forward.1} parent=1 // pred_region
      _
    $region41: #{forward.1} parent=1 // pred_fallthru
      _
    // Predicated region
    $region42: #{forward.1} parent=1 // pred_check
      _
    $region43: #{forward.1} parent=1 // pred_check_branch
      %820 = sbr.rel (0) target = $region45
    $region44: #{forward.1} parent=1 // pred_region
      _
    $region45: #{forward.1} parent=1 // pred_fallthru
      _
    %821 = vsyncpa [#allocation4], 1
    %822 = vsyncpa [#allocation6], 1

</llo_original>
